<compile_context>
chip_gen: v6e
topology: v6e:2x2x1
jax: 0.10.0
libtpu: 0.0.40
codegen_flags: <defaults>
</compile_context>

<pallas_src>
import jax
import jax.numpy as jnp
from jax.experimental import pallas as pl
from jax.experimental.pallas import tpu as pltpu

C0 = 0.28209479177387814          # SH DC normalization constant (from forward)
INV_C0 = 1.0 / C0
REWEIGHTING = True                # cfg.mvsgs.reweighting

_LANE = 128
_ATTR_TILE_CAP = 32768            # lanes per grid step for the attribute kernel
_BLEND_COLS = 512                 # lane width of the flattened blend view
_BLEND_ROW_TILE_CAP = 1024        # sublane rows per grid step for the blend kernel


def _round_up(x, m):
    return ((x + m - 1) // m) * m


# ----------------------------------------------------------------------------
# Shared elementwise math (used both inside the kernels and by the tiny-size
# XLA-fused fallback paths).
# ----------------------------------------------------------------------------
def _gs_attr_math_cf(x):
    """x: [14, T] (rows: xyz, color, opacity, scale, rot) -> [17, T] attributes."""
    xyz = x[0:3, :]
    col = (x[3:6, :] - 0.5) * INV_C0
    op = x[6:7, :]
    opa = jnp.log(op) - jnp.log1p(-op)               # inverse_sigmoid
    scl = jnp.minimum(jnp.log(x[7:10, :]), -5.0)     # scale[scale > -5] = -5 (cap)
    rot = x[10:14, :]
    return jnp.concatenate([xyz, jnp.zeros_like(xyz), col, opa, scl, rot], axis=0)


def _blend_math(r0, vr):
    if REWEIGHTING:
        return (r0 + vr * 4.0) * 0.2
    return (r0 + vr) * 0.5


# ----------------------------------------------------------------------------
# Kernel 1: Gaussian-splat attribute packing, channels-first / lane-dense.
#   input  : packed [14, T]   (T = lane-dense tile, multiple of 128)
#   output : [17, T]  (x,y,z, nx,ny,nz, f_dc_0..2, opacity, scale_0..2, rot_0..3)
# Single full-block store; all row slicing is static sublane ranges on the
# loaded value, so no masked sub-8-sublane stores.
# ----------------------------------------------------------------------------
def _gs_attr_kernel(packed_ref, out_ref):
    out_ref[...] = _gs_attr_math_cf(packed_ref[...])


def gs_attributes(xyz, color_out, opacity_out, scale_out, rot_out,
                  *, channels_last=False):
    """Returns attributes; channels-first [17, N] by default (PLY row layout
    preserved as rows)."""
    N = xyz.shape[0]
    packed = jnp.concatenate(
        [xyz.astype(jnp.float32).reshape(N, 3),
         color_out.astype(jnp.float32).reshape(N, 3),
         opacity_out.astype(jnp.float32).reshape(N, 1),
         scale_out.astype(jnp.float32).reshape(N, 3),
         rot_out.astype(jnp.float32).reshape(N, 4)], axis=1)          # [N, 14]

    if N < _LANE:
        # Tiny-N regime: pallas_call launch + pad copies dominate — let XLA fuse.
        attrs_cf = _gs_attr_math_cf(packed.T)
    else:
        n_lanes = _round_up(N, _LANE)
        # >=2 grid steps when possible so the "parallel" axis shards v7x's 2 TCs.
        target_steps = max(2, pl.cdiv(n_lanes, _ATTR_TILE_CAP))
        tile_n = _round_up(pl.cdiv(n_lanes, target_steps), _LANE)
        n_pad = _round_up(n_lanes, tile_n)

        packed_t = packed.T                                           # [14, N]
        if n_pad != N:
            # 0.5 keeps log/log1p finite in padded lanes (they are sliced off).
            packed_t = jnp.pad(packed_t, ((0, 0), (0, n_pad - N)),
                               constant_values=0.5)

        attrs_cf = pl.pallas_call(
            _gs_attr_kernel,
            out_shape=jax.ShapeDtypeStruct((17, n_pad), jnp.float32),
            grid=(n_pad // tile_n,),
            in_specs=[pl.BlockSpec((14, tile_n), lambda i: (0, i))],
            out_specs=pl.BlockSpec((17, tile_n), lambda i: (0, i)),
            compiler_params=pltpu.CompilerParams(
                dimension_semantics=("parallel",)),
        )(packed_t)
        if n_pad != N:
            attrs_cf = attrs_cf[:, :N]

    if channels_last:
        # TODO(synk): only for consumers that require the original [N, 17]
        # layout; this is a full extra HBM relayout pass — prefer channels-first.
        return attrs_cf.T
    return attrs_cf                                                   # [17, N]


# ----------------------------------------------------------------------------
# Kernel 2: novel-view reweighting blend (render_novel_i_0 + rgb_vr * 4) / 5,
# operating on a fully sublane/lane-dense flattened (rows, cols) view.
# ----------------------------------------------------------------------------
def _blend_kernel(r0_ref, vr_ref, out_ref):
    out_ref[...] = _blend_math(r0_ref[...], vr_ref[...])


def blend_and_flatten_rgb(render_novel_0, rgb_vr, *, channels_last=False):
    """render_novel_0, rgb_vr: [B, 3, H, W] -> [B, 3, H*W] (channels-first by
    default; channels_last=True restores the original [B, H*W, 3])."""
    B, C, H, W = render_novel_0.shape
    HW = H * W
    r0 = render_novel_0.astype(jnp.float32).reshape(-1)
    vr = rgb_vr.astype(jnp.float32).reshape(-1)
    total = r0.shape[0]

    if total < 8 * _LANE:
        # Tiny-frame regime: let XLA fuse the 2-FLOP/elem blend.
        blended = _blend_math(r0, vr)
    else:
        cols = _BLEND_COLS if total >= 8 * _BLEND_COLS else _LANE
        rows = pl.cdiv(total, cols)
        target_steps = max(2, pl.cdiv(rows, _BLEND_ROW_TILE_CAP))
        row_tile = _round_up(pl.cdiv(rows, target_steps), 8)
        rows_pad = _round_up(rows, row_tile)
        pad = rows_pad * cols - total
        if pad:
            r0 = jnp.pad(r0, (0, pad))
            vr = jnp.pad(vr, (0, pad))
        r0 = r0.reshape(rows_pad, cols)
        vr = vr.reshape(rows_pad, cols)

        spec = pl.BlockSpec((row_tile, cols), lambda i: (i, 0))
        blended = pl.pallas_call(
            _blend_kernel,
            out_shape=jax.ShapeDtypeStruct((rows_pad, cols), jnp.float32),
            grid=(rows_pad // row_tile,),
            in_specs=[spec, spec],
            out_specs=spec,
            compiler_params=pltpu.CompilerParams(
                dimension_semantics=("parallel",)),
        )(r0, vr)
        blended = blended.reshape(-1)
        if pad:
            blended = blended[:total]

    blended = blended.reshape(B, C, HW)           # == render_novel.flatten(2)
    if channels_last:
        # TODO(synk): original [B, H*W, 3] layout; defer this relayout to the
        # consumer when possible (it costs more than the blend itself).
        return blended.transpose(0, 2, 1)
    return blended                                # [B, 3, H*W]


# ----------------------------------------------------------------------------
# Fragment of Network.forward that is fully specified by the given source.
# ----------------------------------------------------------------------------
_ATTR_NAMES = ["x", "y", "z", "nx", "ny", "nz",
               "f_dc_0", "f_dc_1", "f_dc_2", "opacity",
               "scale_0", "scale_1", "scale_2",
               "rot_0", "rot_1", "rot_2", "rot_3"]


def network_forward_fragment(gs_outputs, render_novel_0, *, channels_last=False):
    xyz, rot_out, scale_out, opacity_out, color_out, rgb_vr = gs_outputs
    attributes = gs_attributes(xyz, color_out, opacity_out, scale_out, rot_out,
                               channels_last=channels_last)
    GS_scene = {
        "data": attributes,
        "layout": "[N,17]" if channels_last else "[17,N] (channels-first)",
        "dtype_full": [(a, "f4") for a in _ATTR_NAMES],
    }
    ret = {"rgb_level0": blend_and_flatten_rgb(render_novel_0, rgb_vr,
                                               channels_last=channels_last)}
    return ret, GS_scene


if __name__ == "__main__":
    key = jax.random.PRNGKey(0)
    k = jax.random.split(key, 7)

    # Small, shape-consistent synthetic inputs (deterministic).
    N = 1024                       # number of Gaussians (N_rays * N_samples)
    B, H, W = 2, 16, 16            # batch / render size

    xyz = jax.random.normal(k[0], (N, 3), jnp.float32)
    color_out = jax.nn.sigmoid(jax.random.normal(k[1], (N, 3), jnp.float32))
    opacity_out = jax.nn.sigmoid(jax.random.normal(k[2], (N, 1), jnp.float32))
    scale_out = jax.nn.softplus(jax.random.normal(k[3], (N, 3), jnp.float32)) + 1e-4
    rot_out = jax.random.normal(k[4], (N, 4), jnp.float32)
    rgb_vr = jax.nn.sigmoid(jax.random.normal(k[5], (B, 3, H, W), jnp.float32))
    render_novel_0 = jax.nn.sigmoid(jax.random.normal(k[6], (B, 3, H, W), jnp.float32))

    gs_outputs = (xyz, rot_out, scale_out, opacity_out, color_out, rgb_vr)

    # Fast path: channels-first outputs (no trailing relayouts in the hot path).
    ret, GS_scene = network_forward_fragment(gs_outputs, render_novel_0)
    jax.block_until_ready(ret["rgb_level0"])
    jax.block_until_ready(GS_scene["data"])

    # Pure-JAX reference (same math as the PyTorch source, original layouts).
    ref_color = (color_out - 0.5) / C0
    ref_opac = jnp.log(opacity_out / (1.0 - opacity_out))
    ref_scale = jnp.minimum(jnp.log(scale_out), -5.0)
    ref_attr = jnp.concatenate(
        [xyz, jnp.zeros_like(xyz), ref_color, ref_opac, ref_scale, rot_out], axis=1)
    ref_rgb = ((render_novel_0 + rgb_vr * 4.0) / 5.0).reshape(B, 3, H * W)

    assert GS_scene["data"].shape == (17, N)
    assert ret["rgb_level0"].shape == (B, 3, H * W)
    assert jnp.allclose(GS_scene["data"], ref_attr.T, atol=1e-5, rtol=1e-5)
    assert jnp.allclose(ret["rgb_level0"], ref_rgb, atol=1e-6, rtol=1e-6)

    # Compatibility path: original [N,17] / [B,HW,3] layouts (relayout deferred
    # to here, off the hot path) — verifies exact semantics of the module.
    ret_cl, GS_scene_cl = network_forward_fragment(gs_outputs, render_novel_0,
                                                   channels_last=True)
    jax.block_until_ready(ret_cl["rgb_level0"])
    assert GS_scene_cl["data"].shape == (N, 17)
    assert ret_cl["rgb_level0"].shape == (B, H * W, 3)
    assert jnp.allclose(GS_scene_cl["data"], ref_attr, atol=1e-5, rtol=1e-5)
    assert jnp.allclose(ret_cl["rgb_level0"], ref_rgb.transpose(0, 2, 1),
                        atol=1e-6, rtol=1e-6)

    print("KERNEL_OK")
</pallas_src>

<mosaic_0001>
module attributes {stable_mosaic.version = 11 : i64} {
  func.func @_gs_attr_kernel(%arg0: i32, %arg1: memref<14x512xf32, #tpu.memory_space<vmem>>, %arg2: memref<17x512xf32, #tpu.memory_space<vmem>>) attributes {dimension_semantics = [#tpu.dimension_semantics<parallel>], iteration_bounds = array<i64: 2>, scalar_prefetch = 0 : i64, scratch_operands = 0 : i64, tpu.core_type = #tpu.core_type<tc>, window_params = [{transform_indices = @transform_0, window_bounds = array<i64: 14, 512>}, {transform_indices = @transform_1, window_bounds = array<i64: 17, 512>}]} {
    %c0 = arith.constant 0 : index
    %c0_0 = arith.constant 0 : index
    %0 = vector.load %arg1[%c0, %c0_0] : memref<14x512xf32, #tpu.memory_space<vmem>>, vector<14x512xf32>
    %1 = vector.extract_strided_slice %0 {offsets = [0, 0], sizes = [3, 512], strides = [1, 1]} : vector<14x512xf32> to vector<3x512xf32>
    %2 = vector.extract_strided_slice %0 {offsets = [3, 0], sizes = [3, 512], strides = [1, 1]} : vector<14x512xf32> to vector<3x512xf32>
    %cst = arith.constant 5.000000e-01 : f32
    %3 = vector.broadcast %cst : f32 to vector<3x512xf32>
    %4 = arith.subf %2, %3 : vector<3x512xf32>
    %cst_1 = arith.constant 3.54490781 : f32
    %5 = vector.broadcast %cst_1 : f32 to vector<3x512xf32>
    %6 = arith.mulf %4, %5 : vector<3x512xf32>
    %7 = vector.extract_strided_slice %0 {offsets = [6, 0], sizes = [1, 512], strides = [1, 1]} : vector<14x512xf32> to vector<1x512xf32>
    %8 = math.log %7 : vector<1x512xf32>
    %cst_2 = arith.constant 0.000000e+00 : f32
    %9 = vector.broadcast %cst_2 : f32 to vector<1x512xf32>
    %10 = arith.subf %9, %7 : vector<1x512xf32>
    %11 = math.log1p %10 : vector<1x512xf32>
    %12 = arith.subf %8, %11 : vector<1x512xf32>
    %13 = vector.extract_strided_slice %0 {offsets = [7, 0], sizes = [3, 512], strides = [1, 1]} : vector<14x512xf32> to vector<3x512xf32>
    %14 = math.log %13 : vector<3x512xf32>
    %cst_3 = arith.constant -5.000000e+00 : f32
    %15 = vector.broadcast %cst_3 : f32 to vector<3x512xf32>
    %16 = arith.minimumf %14, %15 : vector<3x512xf32>
    %17 = vector.extract_strided_slice %0 {offsets = [10, 0], sizes = [4, 512], strides = [1, 1]} : vector<14x512xf32> to vector<4x512xf32>
    %cst_4 = arith.constant 0.000000e+00 : f32
    %18 = vector.broadcast %cst_4 : f32 to vector<3x512xf32>
    %19 = tpu.concatenate %1, %18, %6, %12, %16, %17 in 0 : vector<3x512xf32>, vector<3x512xf32>, vector<3x512xf32>, vector<1x512xf32>, vector<3x512xf32>, vector<4x512xf32> -> vector<17x512xf32>
    %c0_5 = arith.constant 0 : index
    %c0_6 = arith.constant 0 : index
    %20 = vector.load %arg2[%c0_5, %c0_6] : memref<17x512xf32, #tpu.memory_space<vmem>>, vector<17x512xf32>
    tpu.vector_store %arg2[%c0_5, %c0_6], %19 {strides = array<i32>} : memref<17x512xf32, #tpu.memory_space<vmem>>, vector<17x512xf32>,
    return
  }
  func.func @transform_0(%arg0: i32) -> (i32, i32) {
    %c0_i32 = arith.constant 0 : i32
    %c0_i32_0 = arith.constant 0 : i32
    return %c0_i32, %arg0 : i32, i32
  }
  func.func @transform_1(%arg0: i32) -> (i32, i32) {
    %c0_i32 = arith.constant 0 : i32
    %c0_i32_0 = arith.constant 0 : i32
    return %c0_i32, %arg0 : i32, i32
  }
}

</mosaic_0001>

<llo_original>
// kernel: tpu_custom_call.1
$region0: #{tpu_custom_call.1}
  #allocation0 [shape = 'u32[]', space=smem, size = 0x4, offset = 0x4, fixed_abs, tag = 'smem constant byte address 0x4 - core index']
  #allocation1 [shape = 'u32[144,128]{1,0:T(1,128)}', space=vmem, size = 0x12000, scoped, tag = 'internal scratch']
  %s0 = inlined_call_operand.hbm [shape: f32[14,1024], index: 0, kind: input, shape index: {}]
  %s1 = inlined_call_operand.hbm [shape: f32[17,1024], index: 1, kind: output, shape index: {}]
  %s2 = sld [smem:[#allocation0]]
  $region41: #{tpu_custom_call.1} parent=0
    _
  %s4 = ssub.s32 1, %s2
  %s5 = scalar_select 0, %s4, %s2
  $region1: #{tpu_custom_call.1} parent=0
    #allocation2 [shape = 'u8[65536]{0}', space=vmem, size = 0x10000, scoped, tag = 'input window, operand 0']
    #allocation3 [shape = 's32[2]{0}', space=sflag, size = 0x8, scoped, tag = 'scoped memory for tpu_custom_call.1']
    #allocation4 [shape = 's32[2]{0}', space=sflag, size = 0x8, scoped, tag = 'scoped memory for tpu_custom_call.1']
    #allocation5 [shape = 'u8[98304]{0}', space=vmem, size = 0x18000, scoped, tag = 'output window, operand 0']
    %6 = vsyncpa [#allocation3], 0
    %s7 = scalar_lea.sflag [#allocation3], 1
    %8 = vsyncpa %s7, 0
    %9 = vsyncpa [#allocation4], 0
    %s10 = scalar_lea.sflag [#allocation4], 1
    %11 = vsyncpa %s10, 0
    loop: start=0, step=1, limit=4
    $region2: #{tpu_custom_call.1} parent=1 // loop_pre_header
      _
    $region3: #{tpu_custom_call.1} parent=1 // loop_header
      %s13 = sphi 0, %s17
      %p14 = scmp.ge.s32.totalorder %s13, 4
      %s23 = sphi 0, %s25
      %s26 = sphi 0, %s23
      %s27 = sphi 0, %s26
      %s43 = sphi 0, %s27
      %s49 = sphi 0, %s51
      %s52 = sphi 0, %s49
      %s53 = sphi 0, %s52
      %s69 = sphi 0, %s53
    $region4: #{tpu_custom_call.1} parent=1 // loop_header_branch
      %16 = sbr.rel (%p14) target = $region8
    $region5: #{tpu_custom_call.1} parent=1 // loop_body
      %s18 = ssub.s32 %s13, 1
      %s19 = ssub.s32 %s13, 2
      %s20 = sadd.s32 %s13, 1
      %s21 = ssub.s32 %s13, %s20
      %p22 = scmp.eq.s32.totalorder %s21, 0
      %s24 = sadd.s32 %s23, 1
      %s25 = scalar_select %p22, %s23, %s24
      %p28 = pneg %p22
      %p29 = scmp.eq.s32.totalorder %s13, 1
      %p30 = por %p28, %p29
      %p31 = scmp.ne.s32.totalorder %s23, %s26
      %p32 = scmp.eq.s32.totalorder %s13, 0
      %p33 = por %p31, %p32
      %p34 = scmp.ne.s32.totalorder %s23, %s26
      %p35 = scmp.eq.s32.totalorder %s18, 1
      %p36 = por %p34, %p35
      %p37 = scmp.ne.s32.totalorder %s26, %s27
      %p38 = scmp.eq.s32.totalorder %s18, 0
      %p39 = por %p37, %p38
      %p40 = scmp.ne.s32.totalorder %s26, %s27
      %p41 = scmp.eq.s32.totalorder %s19, 1
      %p42 = por %p40, %p41
      %p44 = scmp.ne.s32.totalorder %s27, %s43
      %p45 = scmp.eq.s32.totalorder %s19, 0
      %p46 = por %p44, %p45
      %s47 = ssub.s32 %s13, %s20
      %p48 = scmp.eq.s32.totalorder %s47, 0
      %s50 = sadd.s32 %s49, 1
      %s51 = scalar_select %p48, %s49, %s50
      %p54 = pneg %p48
      %p55 = scmp.eq.s32.totalorder %s13, 1
      %p56 = por %p54, %p55
      %p57 = scmp.ne.s32.totalorder %s49, %s52
      %p58 = scmp.eq.s32.totalorder %s13, 0
      %p59 = por %p57, %p58
      %p60 = scmp.ne.s32.totalorder %s49, %s52
      %p61 = scmp.eq.s32.totalorder %s18, 1
      %p62 = por %p60, %p61
      %p63 = scmp.ne.s32.totalorder %s52, %s53
      %p64 = scmp.eq.s32.totalorder %s18, 0
      %p65 = por %p63, %p64
      %p66 = scmp.ne.s32.totalorder %s52, %s53
      %p67 = scmp.eq.s32.totalorder %s19, 1
      %p68 = por %p66, %p67
      %p70 = scmp.ne.s32.totalorder %s53, %s69
      %p71 = scmp.eq.s32.totalorder %s19, 0
      %p72 = por %p70, %p71
      %p73 = scmp.le.s32.totalorder 1, %s13
      %p74 = scmp.lt.s32.totalorder %s13, 3
      %p75 = pnand %p73, %p74
      %p76 = pneg %p75
      // Predicated region
      $region9: #{tpu_custom_call.1} parent=5 // pred_check
        _
      $region10: #{tpu_custom_call.1} parent=5 // pred_check_branch
        %78 = sbr.rel (%p75) target = $region12
      $region11: #{tpu_custom_call.1} parent=5 // pred_region
        %s79 = ssub.s32 %s13, 1
      $region12: #{tpu_custom_call.1} parent=5 // pred_fallthru
        _
      %p80 = scmp.lt.s32.totalorder %s13, 2
      // Predicated region
      $region13: #{tpu_custom_call.1} parent=5 // pred_check
        %p81 = pneg %p80
      $region14: #{tpu_custom_call.1} parent=5 // pred_check_branch
        %83 = sbr.rel (%p81) target = $region16
      $region15: #{tpu_custom_call.1} parent=5 // pred_region
        // Predicated region
        $region17: #{tpu_custom_call.1} parent=15 // pred_check
          %p84 = pneg %p33
        $region18: #{tpu_custom_call.1} parent=15 // pred_check_branch
          %86 = sbr.rel (%p84) target = $region20
        $region19: #{tpu_custom_call.1} parent=15 // pred_region
          %s87 = sand.u32 %s23, 1
          %s88 = scalar_lea.sflag [#allocation3], %s87
          %s89 = sand.u32 %s23, 1
          %s90 = smul.addr %s89, 64
          %s91 = scalar_lea.vmem [#allocation2], %s90
          %s92 = smul.u32 4, %s13
          %s94 = ssub.s32 1024, 1024
          %95 = vsyncadd %s88, %s94
          %s96 = smul.addr %s92, 128
          %s97 = scalar_lea.hbm %s0, %s96
          %s98 = sshll.u32 %s91, 4
          %s99 = int_to_ptr.vmem [resolvable:$true] %s98
          %104 = dma.hbm_to_vmem [thread:$0]  %s97, 1024, %s99, %s88, 1024, 512, 32
        $region20: #{tpu_custom_call.1} parent=15 // pred_fallthru
          _
      $region16: #{tpu_custom_call.1} parent=5 // pred_fallthru
        _
      %p105 = scmp.le.s32.totalorder 1, %s13
      %p106 = scmp.lt.s32.totalorder %s13, 3
      %p107 = pnand %p105, %p106
      %p108 = pneg %p107
      // Predicated region
      $region21: #{tpu_custom_call.1} parent=5 // pred_check
        _
      $region22: #{tpu_custom_call.1} parent=5 // pred_check_branch
        %110 = sbr.rel (%p107) target = $region24
      $region23: #{tpu_custom_call.1} parent=5 // pred_region
        %s111 = ssub.s32 %s13, 1
        %s112 = sand.u32 %s26, 1
        %s113 = scalar_lea.sflag [#allocation3], %s112
        %s114 = sand.u32 %s26, 1
        %s115 = smul.addr %s114, 64
        %s116 = scalar_lea.vmem [#allocation2], %s115
        // Predicated region
        $region25: #{tpu_custom_call.1} parent=23 // pred_check
          %p117 = pneg %p39
        $region26: #{tpu_custom_call.1} parent=23 // pred_check_branch
          %119 = sbr.rel (%p117) target = $region28
        $region27: #{tpu_custom_call.1} parent=23 // pred_region
          %120 = dma.done %s113, 1024
        $region28: #{tpu_custom_call.1} parent=23 // pred_fallthru
          _
        %s121 = sand.u32 %s26, 1
        %s122 = scalar_lea.sflag [#allocation3], %s121
        %s123 = sand.u32 %s26, 1
        %s124 = smul.addr %s123, 64
        %s125 = scalar_lea.vmem [#allocation2], %s124
        %p126 = pneg %p39
        %p127 = pneg %p36
        %p128 = pneg %p65
        %p129 = pneg %p62
        %s130 = sand.u32 %s52, 1
        %s131 = scalar_lea.sflag [#allocation4], %s130
        %s132 = sand.u32 %s52, 1
        %s133 = smul.addr %s132, 96
        %s134 = scalar_lea.vmem [#allocation5], %s133
        %s135 = smul.u32 4, %s18
        %s136 = smul.u32 4, %s18
        %v137 = vld [vmem:[%s116] sm:$0xff]
        %v138 = vld [vmem:[%s116 + $0x8] sm:$0xff]
        %v139 = vld [vmem:[%s116 + $0x10] sm:$0xff]
        %v140 = vld [vmem:[%s116 + $0x18] sm:$0xff]
        %v141 = vld [vmem:[%s116 + $0x20] sm:$0x3f]
        %v142 = vld [vmem:[%s116 + $0x28] sm:$0x3f]
        %v143 = vld [vmem:[%s116 + $0x30] sm:$0x3f]
        %v144 = vld [vmem:[%s116 + $0x38] sm:$0x3f]
        %v145 = vsub.f32 %v137, 0.5
        %v146 = vsub.f32 %v138, 0.5
        %v147 = vsub.f32 %v139, 0.5
        %v148 = vsub.f32 %v140, 0.5
        %v149 = vmul.f32 %v145, 3.5449078
        %v150 = vmul.f32 %v146, 3.5449078
        %v151 = vmul.f32 %v147, 3.5449078
        %v152 = vmul.f32 %v148, 3.5449078
        %v153 = vlog2.pop %v137
        %v154 = vmul.f32 %v153, 0.6931472
        %v155 = vlog2.pop %v138
        %v156 = vmul.f32 %v155, 0.6931472
        %v157 = vlog2.pop %v139
        %v158 = vmul.f32 %v157, 0.6931472
        %v159 = vlog2.pop %v140
        %v160 = vmul.f32 %v159, 0.6931472
        %v161 = vsub.f32 0.0, %v137
        %v162 = vsub.f32 0.0, %v138
        %v163 = vsub.f32 0.0, %v139
        %v164 = vsub.f32 0.0, %v140
        %v165 = vadd.f32 %v161, 1.0
        %v166 = vlog2.pop %v165
        %v167 = vmul.f32 %v166, 0.6931472
        %v168 = vmul.f32 -0.5, %v161
        %v169 = vadd.f32 %v168, 1.0
        %v170 = vmul.f32 %v169, %v161
        %v171 = vand.u32 2147483647, %v161
        %vm172 = vcmp.lt.f32.partialorder %v171, 0.0004427343
        %v173 = vsel %vm172, %v170, %v167
        %v174 = vadd.f32 %v162, 1.0
        %v175 = vlog2.pop %v174
        %v176 = vmul.f32 %v175, 0.6931472
        %v177 = vmul.f32 -0.5, %v162
        %v178 = vadd.f32 %v177, 1.0
        %v179 = vmul.f32 %v178, %v162
        %v180 = vand.u32 2147483647, %v162
        %vm181 = vcmp.lt.f32.partialorder %v180, 0.0004427343
        %v182 = vsel %vm181, %v179, %v176
        %v183 = vadd.f32 %v163, 1.0
        %v184 = vlog2.pop %v183
        %v185 = vmul.f32 %v184, 0.6931472
        %v186 = vmul.f32 -0.5, %v163
        %v187 = vadd.f32 %v186, 1.0
        %v188 = vmul.f32 %v187, %v163
        %v189 = vand.u32 2147483647, %v163
        %vm190 = vcmp.lt.f32.partialorder %v189, 0.0004427343
        %v191 = vsel %vm190, %v188, %v185
        %v192 = vadd.f32 %v164, 1.0
        %v193 = vlog2.pop %v192
        %v194 = vmul.f32 %v193, 0.6931472
        %v195 = vmul.f32 -0.5, %v164
        %v196 = vadd.f32 %v195, 1.0
        %v197 = vmul.f32 %v196, %v164
        %v198 = vand.u32 2147483647, %v164
        %vm199 = vcmp.lt.f32.partialorder %v198, 0.0004427343
        %v200 = vsel %vm199, %v197, %v194
        %v201 = vsub.f32 %v154, %v173
        %v202 = vsub.f32 %v156, %v182
        %v203 = vsub.f32 %v158, %v191
        %v204 = vsub.f32 %v160, %v200
        %v205 = vlog2.pop %v141
        %v206 = vmul.f32 %v205, 0.6931472
        %v207 = vlog2.pop %v142
        %v208 = vmul.f32 %v207, 0.6931472
        %v209 = vlog2.pop %v143
        %v210 = vmul.f32 %v209, 0.6931472
        %v211 = vlog2.pop %v144
        %v212 = vmul.f32 %v211, 0.6931472
        %v213 = vmin.f32 %v154, -5.0
        %v214 = vmin.f32 %v156, -5.0
        %v215 = vmin.f32 %v158, -5.0
        %v216 = vmin.f32 %v160, -5.0
        %v217 = vmin.f32 %v206, -5.0
        %v218 = vmin.f32 %v208, -5.0
        %v219 = vmin.f32 %v210, -5.0
        %v220 = vmin.f32 %v212, -5.0
        %v225 = vrot.slane %v149, 5
        %v226 = vrot.slane %v150, 5
        %v227 = vrot.slane %v151, 5
        %v228 = vrot.slane %v152, 5
        %v237 = vrot.slane %v201, 5
        %v238 = vrot.slane %v202, 5
        %v239 = vrot.slane %v203, 5
        %v240 = vrot.slane %v204, 5
        %vm253 = vcmask 1042432
        %v254 = vrot.slane %v213, 5
        %v255 = vrot.slane %v217, 5
        %v256 = vsel %vm253, %v254, %v255
        %v257 = vrot.slane %v214, 5
        %v258 = vrot.slane %v218, 5
        %v259 = vsel %vm253, %v257, %v258
        %v260 = vrot.slane %v215, 5
        %v261 = vrot.slane %v219, 5
        %v262 = vsel %vm253, %v260, %v261
        %v263 = vrot.slane %v216, 5
        %v264 = vrot.slane %v220, 5
        %v265 = vsel %vm253, %v263, %v264
        %v274 = vrot.slane %v141, 5
        %v275 = vrot.slane %v142, 5
        %v276 = vrot.slane %v143, 5
        %v277 = vrot.slane %v144, 5
        %v282 = vsel %vm253, %v137, 0.0
        %v283 = vsel %vm253, %v138, 0.0
        %v284 = vsel %vm253, %v139, 0.0
        %v285 = vsel %vm253, %v140, 0.0
        %vm286 = vcmask 1045504
        %v287 = vsel %vm286, %v282, %v225
        %v288 = vsel %vm286, %v283, %v226
        %v289 = vsel %vm286, %v284, %v227
        %v290 = vsel %vm286, %v285, %v228
        %vm291 = vcmask 1040384
        %v292 = vsel %vm291, %v225, %v237
        %v293 = vsel %vm291, %v226, %v238
        %v294 = vsel %vm291, %v227, %v239
        %v295 = vsel %vm291, %v228, %v240
        %vm296 = vcmask 1041408
        %v297 = vsel %vm296, %v292, %v256
        %v298 = vsel %vm296, %v293, %v259
        %v299 = vsel %vm296, %v294, %v262
        %v300 = vsel %vm296, %v295, %v265
        %vm301 = vcmask 1044480
        %v302 = vsel %vm301, %v297, %v274
        %v303 = vsel %vm301, %v298, %v275
        %v304 = vsel %vm301, %v299, %v276
        %v305 = vsel %vm301, %v300, %v277
        %306 = vst [vmem:[%s134] sm:$0xff] %v287
        %307 = vst [vmem:[%s134 + $0x8] sm:$0xff] %v288
        %308 = vst [vmem:[%s134 + $0x10] sm:$0xff] %v289
        %309 = vst [vmem:[%s134 + $0x18] sm:$0xff] %v290
        %310 = vst [vmem:[%s134 + $0x20] sm:$0xff] %v302
        %311 = vst [vmem:[%s134 + $0x28] sm:$0xff] %v303
        %312 = vst [vmem:[%s134 + $0x30] sm:$0xff] %v304
        %313 = vst [vmem:[%s134 + $0x38] sm:$0xff] %v305
        %314 = vst [vmem:[%s134 + $0x40] sm:$0x1] %v274
        %315 = vst [vmem:[%s134 + $0x48] sm:$0x1] %v275
        %316 = vst [vmem:[%s134 + $0x50] sm:$0x1] %v276
        %317 = vst [vmem:[%s134 + $0x58] sm:$0x1] %v277
        %s318 = sand.u32 %s52, 1
        %s319 = scalar_lea.sflag [#allocation4], %s318
        %s320 = sand.u32 %s52, 1
        %s321 = smul.addr %s320, 96
        %s322 = scalar_lea.vmem [#allocation5], %s321
        // Predicated region
        $region29: #{tpu_custom_call.1} parent=23 // pred_check
          %p323 = pneg %p62
        $region30: #{tpu_custom_call.1} parent=23 // pred_check_branch
          %325 = sbr.rel (%p323) target = $region32
        $region31: #{tpu_custom_call.1} parent=23 // pred_region
          %s326 = smul.u32 4, %s18
          %s328 = ssub.s32 1536, 1536
          %329 = vsyncadd %s319, %s328
          %s330 = smul.addr %s326, 128
          %s331 = scalar_lea.hbm %s1, %s330
          %s332 = sshll.u32 %s322, 4
          %s333 = int_to_ptr.vmem [resolvable:$true] %s332
          %338 = dma.vmem_to_hbm [thread:$0]  %s333, 1536, %s331, %s319, 512, 1024, 32
        $region32: #{tpu_custom_call.1} parent=23 // pred_fallthru
          _
      $region24: #{tpu_custom_call.1} parent=5 // pred_fallthru
        _
      %p339 = scmp.le.s32.totalorder 2, %s13
      // Predicated region
      $region33: #{tpu_custom_call.1} parent=5 // pred_check
        %p340 = pneg %p339
      $region34: #{tpu_custom_call.1} parent=5 // pred_check_branch
        %342 = sbr.rel (%p340) target = $region36
      $region35: #{tpu_custom_call.1} parent=5 // pred_region
        %s343 = ssub.s32 %s13, 2
        // Predicated region
        $region37: #{tpu_custom_call.1} parent=35 // pred_check
          %p344 = pneg %p68
        $region38: #{tpu_custom_call.1} parent=35 // pred_check_branch
          %346 = sbr.rel (%p344) target = $region40
        $region39: #{tpu_custom_call.1} parent=35 // pred_region
          %s347 = sand.u32 %s53, 1
          %s348 = scalar_lea.sflag [#allocation4], %s347
          %s349 = sand.u32 %s53, 1
          %s350 = smul.addr %s349, 96
          %s351 = scalar_lea.vmem [#allocation5], %s350
          %352 = dma.done %s348, 1536
        $region40: #{tpu_custom_call.1} parent=35 // pred_fallthru
          _
      $region36: #{tpu_custom_call.1} parent=5 // pred_fallthru
        _
    $region6: #{tpu_custom_call.1} parent=1 // loop_footer
      %s17 = sadd.s32 1, %s13
    $region7: #{tpu_custom_call.1} parent=1 // loop_footer_branch
      %12 = sbr.rel target = $region3
    $region8: #{tpu_custom_call.1} parent=1 // loop_exit
      _
    %353 = vsyncpa [#allocation3], 1
    %s354 = scalar_lea.sflag [#allocation3], 1
    %355 = vsyncpa %s354, 1
    %356 = vsyncpa [#allocation4], 1
    %s357 = scalar_lea.sflag [#allocation4], 1
    %358 = vsyncpa %s357, 1

</llo_original>
